<compile_context>
chip_gen: v6e
topology: v6e:2x2x1
jax: 0.10.0
libtpu: 0.0.40
codegen_flags: <defaults>
</compile_context>

<pallas_src>
import jax
import jax.numpy as jnp
from jax.experimental import pallas as pl
from jax.experimental.pallas import tpu as pltpu

BN_EPS = 1e-5
LANE = 128


def _round_up(n, m):
    return ((n + m - 1) // m) * m


def make_smallnet_forward(w1, b1, gamma, beta, w2, b2):
    """Prepares constant slabs once and returns a jitted forward(x)."""
    in_size, hid = w1.shape
    out_size = w2.shape[1]

    IP = _round_up(in_size, LANE)   # padded input features
    HP = _round_up(hid, LANE)       # padded hidden features
    OP = _round_up(out_size, LANE)  # padded output features
    R = max(IP, HP)                 # weight-slab rows
    P = max(HP, OP)                 # param-slab lane width

    # One bf16 weight slab: [:IP, :HP] = w1, [:HP, HP:HP+OP] = w2.
    # Zero padding contributes nothing to either matmul; padded BN columns
    # stay exactly zero (var=0 -> finite rsqrt, gamma_pad=0 -> scale=0).
    w_slab = jnp.zeros((R, HP + OP), jnp.bfloat16)
    w_slab = w_slab.at[:in_size, :hid].set(
        jnp.asarray(w1, jnp.bfloat16))
    w_slab = w_slab.at[:hid, HP:HP + out_size].set(
        jnp.asarray(w2, jnp.bfloat16))

    # One f32 param slab (BN math stays f32 on all chips, incl. v5e):
    #   row 0: fc1 bias, row 1: BN gamma, row 2: BN beta, row 3: fc2 bias.
    params = jnp.zeros((4, P), jnp.float32)
    params = params.at[0, :hid].set(jnp.reshape(b1, (-1,)).astype(jnp.float32))
    params = params.at[1, :hid].set(jnp.reshape(gamma, (-1,)).astype(jnp.float32))
    params = params.at[2, :hid].set(jnp.reshape(beta, (-1,)).astype(jnp.float32))
    params = params.at[3, :out_size].set(jnp.reshape(b2, (-1,)).astype(jnp.float32))

    def kernel(x_ref, w_ref, p_ref, o_ref):
        # fc1 on the MXU (bf16 operands, f32 accumulation).
        h = jnp.dot(x_ref[...], w_ref[:IP, :HP],
                    preferred_element_type=jnp.float32)          # (B, HP) f32

        # Single load of the packed params, cheap in-vreg row slices.
        p = p_ref[...]                                           # (4, P) f32
        b1_r = p[0:1, :HP]
        gamma_r = p[1:2, :HP]
        beta_r = p[2:3, :HP]
        b2_r = p[3:4, :OP]

        h = h + b1_r  # cancels against the batch-mean subtraction below

        # BatchNorm1d, training mode: biased variance over the full batch,
        # affine fused into one scale/shift (rsqrt -> EUP slot). All f32.
        mean = jnp.mean(h, axis=0, keepdims=True)                # (1, HP)
        centered = h - mean
        var = jnp.mean(centered * centered, axis=0, keepdims=True)
        scale = gamma_r * jax.lax.rsqrt(var + BN_EPS)
        h_bn = centered * scale + beta_r

        # ReLU, back to bf16 for the second MXU pass.
        h_relu = jnp.maximum(h_bn, 0.0).astype(jnp.bfloat16)

        # fc2 on the MXU + bias; lane-dense (B, OP) f32 store.
        o_ref[...] = (jnp.dot(h_relu, w_ref[:HP, HP:HP + OP],
                              preferred_element_type=jnp.float32)
                      + b2_r).astype(o_ref.dtype)

    vmem = pl.BlockSpec(memory_space=pltpu.MemorySpace.VMEM)

    @jax.jit
    def forward(x):
        B = x.shape[0]
        # TODO(synk): for large B (>~512 rows) switch to a batch-tiled grid
        #             with two-pass BN (per-feature sum / sum-of-squares
        #             accumulators, then normalize+ReLU+fc2), batch axis
        #             marked "parallel" to shard over v7x's 2 TensorCores;
        #             whole-batch-resident is only right for small B.
        cost = pl.CostEstimate(
            flops=2 * B * (IP * HP + HP * OP),
            transcendentals=HP,
            bytes_accessed=(2 * R * (HP + OP)    # bf16 weight slab
                            + 4 * 4 * P          # f32 param slab
                            + 2 * B * IP         # bf16 x
                            + 4 * B * OP))       # f32 out
        # Only per-call data movement: pad + cast x (fuses under jit).
        x_p = jnp.zeros((B, IP), jnp.bfloat16).at[:, :in_size].set(
            x.astype(jnp.bfloat16))
        out_p = pl.pallas_call(
            kernel,
            out_shape=jax.ShapeDtypeStruct((B, OP), jnp.float32),
            in_specs=[vmem, vmem, vmem],
            out_specs=vmem,
            cost_estimate=cost,
        )(x_p, w_slab, params)
        # Strip lane padding; under jit this slices/fuses into the consumer.
        return out_p[:, :out_size]

    return forward


def init_params(key, input_size=19, hidden_size=64, output_size=4):
    k1, k2, k3, k4 = jax.random.split(key, 4)
    # PyTorch nn.Linear init: U(-1/sqrt(fan_in), 1/sqrt(fan_in)); deterministic.
    bound1 = 1.0 / jnp.sqrt(jnp.float32(input_size))
    bound2 = 1.0 / jnp.sqrt(jnp.float32(hidden_size))
    w1 = jax.random.uniform(k1, (input_size, hidden_size), jnp.float32,
                            -bound1, bound1)            # stored as (in, hidden)
    b1 = jax.random.uniform(k2, (hidden_size,), jnp.float32, -bound1, bound1)
    gamma = jnp.ones((hidden_size,), jnp.float32)       # BatchNorm1d weight
    beta = jnp.zeros((hidden_size,), jnp.float32)       # BatchNorm1d bias
    w2 = jax.random.uniform(k3, (hidden_size, output_size), jnp.float32,
                            -bound2, bound2)            # stored as (hidden, out)
    b2 = jax.random.uniform(k4, (output_size,), jnp.float32, -bound2, bound2)
    return w1, b1, gamma, beta, w2, b2


if __name__ == "__main__":
    key = jax.random.PRNGKey(0)
    k_x, k_p = jax.random.split(key)

    batch, input_size, hidden_size, output_size = 8, 19, 64, 4
    x = jax.random.normal(k_x, (batch, input_size), jnp.float32)
    w1, b1, gamma, beta, w2, b2 = init_params(
        k_p, input_size, hidden_size, output_size)

    forward = make_smallnet_forward(w1, b1, gamma, beta, w2, b2)
    out = forward(x)
    jax.block_until_ready(out)

    # Pure-JAX f32 reference (faithful to the PyTorch train-mode forward).
    h = x @ w1 + b1
    mean = jnp.mean(h, axis=0, keepdims=True)
    var = jnp.mean((h - mean) ** 2, axis=0, keepdims=True)
    h = (h - mean) * jax.lax.rsqrt(var + BN_EPS) * gamma + beta
    ref = jnp.maximum(h, 0.0) @ w2 + b2

    assert out.shape == (batch, output_size)
    # bf16 matmul operands (f32 accumulation) -> compare at bf16 tolerance.
    assert jnp.allclose(out, ref, atol=2e-2, rtol=2e-2), (
        float(jnp.max(jnp.abs(out - ref))))

    print("KERNEL_OK")
</pallas_src>

<mosaic_0001>
module attributes {stable_mosaic.version = 11 : i64} {
  func.func @kernel(%arg0: memref<8x128xbf16, #tpu.memory_space<vmem>>, %arg1: memref<128x256xbf16, #tpu.memory_space<vmem>>, %arg2: memref<4x128xf32, #tpu.memory_space<vmem>>, %arg3: memref<8x128xf32, #tpu.memory_space<vmem>>) attributes {dimension_semantics = [], scalar_prefetch = 0 : i64, scratch_operands = 0 : i64, tpu.core_type = #tpu.core_type<tc>} {
    %c0 = arith.constant 0 : index
    %c0_0 = arith.constant 0 : index
    %0 = vector.load %arg0[%c0, %c0_0] : memref<8x128xbf16, #tpu.memory_space<vmem>>, vector<8x128xbf16>
    %c0_1 = arith.constant 0 : index
    %c0_2 = arith.constant 0 : index
    %1 = vector.load %arg1[%c0_1, %c0_2] : memref<128x256xbf16, #tpu.memory_space<vmem>>, vector<128x128xbf16>
    %cst = arith.constant dense<0.000000e+00> : vector<8x128xf32>
    %2 = tpu.matmul %0, %1, %cst {dimension_numbers = #tpu.dot_dimension_numbers<[1], [0], [0], [1], [0, 0, 1, 1], [], []>} : vector<8x128xbf16>, vector<128x128xbf16>, vector<8x128xf32> -> vector<8x128xf32>
    %c0_3 = arith.constant 0 : index
    %c0_4 = arith.constant 0 : index
    %3 = vector.load %arg2[%c0_3, %c0_4] : memref<4x128xf32, #tpu.memory_space<vmem>>, vector<4x128xf32>
    %4 = vector.extract_strided_slice %3 {offsets = [0, 0], sizes = [1, 128], strides = [1, 1]} : vector<4x128xf32> to vector<1x128xf32>
    %5 = vector.extract_strided_slice %3 {offsets = [1, 0], sizes = [1, 128], strides = [1, 1]} : vector<4x128xf32> to vector<1x128xf32>
    %6 = vector.extract_strided_slice %3 {offsets = [2, 0], sizes = [1, 128], strides = [1, 1]} : vector<4x128xf32> to vector<1x128xf32>
    %7 = vector.extract_strided_slice %3 {offsets = [3, 0], sizes = [1, 128], strides = [1, 1]} : vector<4x128xf32> to vector<1x128xf32>
    %8 = vector.broadcast %4 : vector<1x128xf32> to vector<8x128xf32>
    %9 = arith.addf %2, %8 : vector<8x128xf32>
    %cst_5 = arith.constant dense<0.000000e+00> : vector<128xf32>
    %10 = vector.multi_reduction <add>, %9, %cst_5 [0] : vector<8x128xf32> to vector<128xf32>
    %11 = vector.shape_cast %10 : vector<128xf32> to vector<1x128xf32>
    %cst_6 = arith.constant 8.000000e+00 : f32
    %12 = vector.broadcast %cst_6 : f32 to vector<1x128xf32>
    %13 = arith.divf %11, %12 : vector<1x128xf32>
    %14 = vector.broadcast %13 : vector<1x128xf32> to vector<8x128xf32>
    %15 = arith.subf %9, %14 : vector<8x128xf32>
    %16 = arith.mulf %15, %15 : vector<8x128xf32>
    %cst_7 = arith.constant dense<0.000000e+00> : vector<128xf32>
    %17 = vector.multi_reduction <add>, %16, %cst_7 [0] : vector<8x128xf32> to vector<128xf32>
    %18 = vector.shape_cast %17 : vector<128xf32> to vector<1x128xf32>
    %cst_8 = arith.constant 8.000000e+00 : f32
    %19 = vector.broadcast %cst_8 : f32 to vector<1x128xf32>
    %20 = arith.divf %18, %19 : vector<1x128xf32>
    %cst_9 = arith.constant 9.99999974E-6 : f32
    %21 = vector.broadcast %cst_9 : f32 to vector<1x128xf32>
    %22 = arith.addf %20, %21 : vector<1x128xf32>
    %23 = math.rsqrt %22 : vector<1x128xf32>
    %24 = arith.mulf %5, %23 : vector<1x128xf32>
    %25 = vector.broadcast %24 : vector<1x128xf32> to vector<8x128xf32>
    %26 = arith.mulf %15, %25 : vector<8x128xf32>
    %27 = vector.broadcast %6 : vector<1x128xf32> to vector<8x128xf32>
    %28 = arith.addf %26, %27 : vector<8x128xf32>
    %cst_10 = arith.constant 0.000000e+00 : f32
    %29 = vector.broadcast %cst_10 : f32 to vector<8x128xf32>
    %30 = arith.maximumf %28, %29 : vector<8x128xf32>
    %31 = arith.truncf %30 : vector<8x128xf32> to vector<8x128xbf16>
    %c0_11 = arith.constant 0 : index
    %c128 = arith.constant 128 : index
    %32 = vector.load %arg1[%c0_11, %c128] : memref<128x256xbf16, #tpu.memory_space<vmem>>, vector<128x128xbf16>
    %cst_12 = arith.constant dense<0.000000e+00> : vector<8x128xf32>
    %33 = tpu.matmul %31, %32, %cst_12 {dimension_numbers = #tpu.dot_dimension_numbers<[1], [0], [0], [1], [0, 0, 1, 1], [], []>} : vector<8x128xbf16>, vector<128x128xbf16>, vector<8x128xf32> -> vector<8x128xf32>
    %34 = vector.broadcast %7 : vector<1x128xf32> to vector<8x128xf32>
    %35 = arith.addf %33, %34 : vector<8x128xf32>
    %c0_13 = arith.constant 0 : index
    %c0_14 = arith.constant 0 : index
    %36 = vector.load %arg3[%c0_13, %c0_14] : memref<8x128xf32, #tpu.memory_space<vmem>>, vector<8x128xf32>
    tpu.vector_store %arg3[%c0_13, %c0_14], %35 {strides = array<i32>} : memref<8x128xf32, #tpu.memory_space<vmem>>, vector<8x128xf32>,
    return
  }
}

</mosaic_0001>

<llo_original>
// kernel: forward.1
$region0: #{forward.1}
  #allocation0 [shape = 'u32[]', space=smem, size = 0x4, offset = 0x4, fixed_abs, tag = 'smem constant byte address 0x4 - core index']
  #allocation1 [shape = 'u32[144,128]{1,0:T(1,128)}', space=vmem, size = 0x12000, scoped, tag = 'internal scratch']
  %s0 = inlined_call_operand.vmem [shape: bf16[8,128], index: 0, kind: input, shape index: {}]
  %s1 = inlined_call_operand.hbm [shape: bf16[128,256], index: 1, kind: input, shape index: {}]
  %s2 = inlined_call_operand.vmem [shape: f32[4,128], index: 2, kind: input, shape index: {}]
  %s3 = inlined_call_operand.vmem [shape: f32[8,128], index: 3, kind: output, shape index: {}]
  %s4 = sld [smem:[#allocation0]]
  $region26: #{forward.1} parent=0
    _
  %s6 = ssub.s32 1, %s4
  %s7 = scalar_select 0, %s6, %s4
  $region1: #{forward.1} parent=0
    #allocation2 [shape = 'u8[65536]{0}', space=vmem, size = 0x10000, scoped, tag = 'input window, operand 1, single buffered']
    #allocation3 [shape = 's32[1]{0}', space=sflag, size = 0x4, scoped, tag = 'scoped memory for forward.1']
    %8 = vsyncpa [#allocation3], 0
    // Predicated region
    $region2: #{forward.1} parent=1 // pred_check
      _
    $region3: #{forward.1} parent=1 // pred_check_branch
      %10 = sbr.rel (0) target = $region5
    $region4: #{forward.1} parent=1 // pred_region
      _
    $region5: #{forward.1} parent=1 // pred_fallthru
      _
    // Predicated region
    $region6: #{forward.1} parent=1 // pred_check
      _
    $region7: #{forward.1} parent=1 // pred_check_branch
      %12 = sbr.rel (0) target = $region9
    $region8: #{forward.1} parent=1 // pred_region
      %s14 = ssub.s32 2048, 2048
      %15 = vsyncadd [#allocation3], %s14
      %s16 = sshll.u32 [#allocation2], 4
      %s17 = int_to_ptr.vmem [resolvable:$true] %s16
      %22 = dma.hbm_to_vmem [thread:$0]  %s1, 2048, %s17, [#allocation3], 128, 128, 8
    $region9: #{forward.1} parent=1 // pred_fallthru
      _
    // Predicated region
    $region10: #{forward.1} parent=1 // pred_check
      _
    $region11: #{forward.1} parent=1 // pred_check_branch
      %24 = sbr.rel (0) target = $region13
    $region12: #{forward.1} parent=1 // pred_region
      _
    $region13: #{forward.1} parent=1 // pred_fallthru
      _
    // Predicated region
    $region14: #{forward.1} parent=1 // pred_check
      _
    $region15: #{forward.1} parent=1 // pred_check_branch
      %26 = sbr.rel (0) target = $region17
    $region16: #{forward.1} parent=1 // pred_region
      %27 = dma.done [#allocation3], 2048
    $region17: #{forward.1} parent=1 // pred_fallthru
      _
    %v29 = vld [vmem:[%s0] sm:$0xf]
    %v30 = vld [vmem:[#allocation2] sm:$0xf]
    %v31 = vld [vmem:[#allocation2 + $0x8] sm:$0xf]
    %v32 = vld [vmem:[#allocation2 + $0x10] sm:$0xf]
    %v33 = vld [vmem:[#allocation2 + $0x18] sm:$0xf]
    %v34 = vld [vmem:[#allocation2 + $0x20] sm:$0xf]
    %v35 = vld [vmem:[#allocation2 + $0x28] sm:$0xf]
    %v36 = vld [vmem:[#allocation2 + $0x30] sm:$0xf]
    %v37 = vld [vmem:[#allocation2 + $0x38] sm:$0xf]
    %v38 = vld [vmem:[#allocation2 + $0x40] sm:$0xf]
    %v39 = vld [vmem:[#allocation2 + $0x48] sm:$0xf]
    %v40 = vld [vmem:[#allocation2 + $0x50] sm:$0xf]
    %v41 = vld [vmem:[#allocation2 + $0x58] sm:$0xf]
    %v42 = vld [vmem:[#allocation2 + $0x60] sm:$0xf]
    %v43 = vld [vmem:[#allocation2 + $0x68] sm:$0xf]
    %v44 = vld [vmem:[#allocation2 + $0x70] sm:$0xf]
    %v45 = vld [vmem:[#allocation2 + $0x78] sm:$0xf]
    %v46 = vld [vmem:[%s2] sm:$0xf]
    %v47 = vlaneseq
    %v48 = vshrl.u32 %v47, 7
    %v49 = vsub.s32 0, %v48
    %v50 = vrot.slane %v46, %v49
    %v67 = vunpack.c.l.b16 %v30
    %v68 = vunpack.c.l.b16 %v31
    %v69 = vunpack.c.l.b16 %v32
    %v70 = vunpack.c.l.b16 %v33
    %v71 = vunpack.c.l.b16 %v34
    %v72 = vunpack.c.l.b16 %v35
    %v73 = vunpack.c.l.b16 %v36
    %v74 = vunpack.c.l.b16 %v37
    %v75 = vunpack.c.l.b16 %v38
    %v76 = vunpack.c.l.b16 %v39
    %v77 = vunpack.c.l.b16 %v40
    %v78 = vunpack.c.l.b16 %v41
    %v79 = vunpack.c.l.b16 %v42
    %v80 = vunpack.c.l.b16 %v43
    %v81 = vunpack.c.l.b16 %v44
    %v82 = vunpack.c.l.b16 %v45
    %v83 = vpack.c.b16 %v68, %v67
    %v84 = vpack.c.b16 %v70, %v69
    %v85 = vpack.c.b16 %v72, %v71
    %v86 = vpack.c.b16 %v74, %v73
    %v87 = vpack.c.b16 %v76, %v75
    %v88 = vpack.c.b16 %v78, %v77
    %v89 = vpack.c.b16 %v80, %v79
    %v90 = vpack.c.b16 %v82, %v81
    %99 = vmatprep.subr.bf16.mxu0 0
    %100 = vmatpush1.bf16.msra.mxu0 %v90
    %101 = vmatprep.subr.bf16.mxu0 0
    %102 = vmatpush1.bf16.msra.mxu0 %v89
    %103 = vmatprep.subr.bf16.mxu0 0
    %104 = vmatpush1.bf16.msra.mxu0 %v88
    %105 = vmatprep.subr.bf16.mxu0 0
    %106 = vmatpush1.bf16.msra.mxu0 %v87
    %107 = vmatprep.subr.bf16.mxu0 0
    %108 = vmatpush1.bf16.msra.mxu0 %v86
    %109 = vmatprep.subr.bf16.mxu0 0
    %110 = vmatpush1.bf16.msra.mxu0 %v85
    %111 = vmatprep.subr.bf16.mxu0 0
    %112 = vmatpush1.bf16.msra.mxu0 %v84
    %113 = vmatprep.subr.bf16.mxu0 0
    %114 = vmatpush1.bf16.msra.mxu0 %v83
    %115 = vmatprep.subr.bf16.mxu0 0
    %116 = vmatpush2.bf16.msra.mxu0 0
    %117 = vmatprep.subr.bf16.mxu0 0
    %118 = vmatpush2.bf16.msra.mxu0 0
    %119 = vmatprep.subr.bf16.mxu0 0
    %120 = vmatpush2.bf16.msra.mxu0 0
    %121 = vmatprep.subr.bf16.mxu0 0
    %122 = vmatpush2.bf16.msra.mxu0 0
    %123 = vmatprep.subr.bf16.mxu0 0
    %124 = vmatpush2.bf16.msra.mxu0 0
    %125 = vmatprep.subr.bf16.mxu0 0
    %126 = vmatpush2.bf16.msra.mxu0 0
    %127 = vmatprep.subr.bf16.mxu0 0
    %128 = vmatpush2.bf16.msra.mxu0 0
    %129 = vmatprep.subr.bf16.mxu0 0
    %130 = vmatpush2.bf16.msra.mxu0 0
    %131 = vmatprep.mubr.bf16.mxu0 0
    %132 = vmatmul.mubr.bf16.gmra.mxu0 %v29
    %v133 = vpop.f32.mrf.mxu0
    %v134 = vadd.f32 %v50, %v133
    %v135 = vpop.f32.mrf.mxu0
    %v136 = vpop.f32.mrf.mxu0
    %v137 = vpop.f32.mrf.mxu0
    %138 = vdwg.mxu0
    %v139 = vrot.slane %v134, 4
    %v140 = vadd.f32 %v134, %v139
    %v141 = vrot.slane %v140, 2
    %v142 = vadd.f32 %v140, %v141
    %v143 = vrot.slane %v142, 1
    %v144 = vadd.f32 %v142, %v143
    %v145 = vrcp.pop 8.0
    %v146 = vmul.f32 %v144, %v145
    %v147 = vsub.f32 %v134, %v146
    %v148 = vmul.f32 %v147, %v147
    %v149 = vrot.slane %v148, 4
    %v150 = vadd.f32 %v148, %v149
    %v151 = vrot.slane %v150, 2
    %v152 = vadd.f32 %v150, %v151
    %v153 = vrot.slane %v152, 1
    %v154 = vadd.f32 %v152, %v153
    %v155 = vmul.f32 %v154, %v145
    %v156 = vadd.f32 %v155, 1e-05
    %v157 = vrsqrt.pop %v156
    %v158 = vmul.f32 %v46, %v157
    %v159 = vlaneseq
    %v160 = vshrl.u32 %v159, 7
    %v161 = vsub.s32 1, %v160
    %v162 = vrot.slane %v158, %v161
    %v163 = vmul.f32 %v147, %v162
    %v164 = vlaneseq
    %v165 = vshrl.u32 %v164, 7
    %v166 = vsub.s32 2, %v165
    %v167 = vrot.slane %v46, %v166
    %v168 = vadd.f32 %v163, %v167
    %v169 = vmax.f32 %v168, 0.0
    %v170 = vpack.c.bf16 %v169, %v169
    %v171 = vld [vmem:[#allocation2 + $0x4] sm:$0xf]
    %v172 = vld [vmem:[#allocation2 + $0xc] sm:$0xf]
    %v173 = vld [vmem:[#allocation2 + $0x14] sm:$0xf]
    %v174 = vld [vmem:[#allocation2 + $0x1c] sm:$0xf]
    %v175 = vld [vmem:[#allocation2 + $0x24] sm:$0xf]
    %v176 = vld [vmem:[#allocation2 + $0x2c] sm:$0xf]
    %v177 = vld [vmem:[#allocation2 + $0x34] sm:$0xf]
    %v178 = vld [vmem:[#allocation2 + $0x3c] sm:$0xf]
    %v179 = vld [vmem:[#allocation2 + $0x44] sm:$0xf]
    %v180 = vld [vmem:[#allocation2 + $0x4c] sm:$0xf]
    %v181 = vld [vmem:[#allocation2 + $0x54] sm:$0xf]
    %v182 = vld [vmem:[#allocation2 + $0x5c] sm:$0xf]
    %v183 = vld [vmem:[#allocation2 + $0x64] sm:$0xf]
    %v184 = vld [vmem:[#allocation2 + $0x6c] sm:$0xf]
    %v185 = vld [vmem:[#allocation2 + $0x74] sm:$0xf]
    %v186 = vld [vmem:[#allocation2 + $0x7c] sm:$0xf]
    %v187 = vlaneseq
    %v188 = vshrl.u32 %v187, 7
    %v189 = vsub.s32 3, %v188
    %v190 = vrot.slane %v46, %v189
    %v207 = vunpack.c.l.b16 %v171
    %v208 = vunpack.c.l.b16 %v172
    %v209 = vunpack.c.l.b16 %v173
    %v210 = vunpack.c.l.b16 %v174
    %v211 = vunpack.c.l.b16 %v175
    %v212 = vunpack.c.l.b16 %v176
    %v213 = vunpack.c.l.b16 %v177
    %v214 = vunpack.c.l.b16 %v178
    %v215 = vunpack.c.l.b16 %v179
    %v216 = vunpack.c.l.b16 %v180
    %v217 = vunpack.c.l.b16 %v181
    %v218 = vunpack.c.l.b16 %v182
    %v219 = vunpack.c.l.b16 %v183
    %v220 = vunpack.c.l.b16 %v184
    %v221 = vunpack.c.l.b16 %v185
    %v222 = vunpack.c.l.b16 %v186
    %v223 = vpack.c.b16 %v208, %v207
    %v224 = vpack.c.b16 %v210, %v209
    %v225 = vpack.c.b16 %v212, %v211
    %v226 = vpack.c.b16 %v214, %v213
    %v227 = vpack.c.b16 %v216, %v215
    %v228 = vpack.c.b16 %v218, %v217
    %v229 = vpack.c.b16 %v220, %v219
    %v230 = vpack.c.b16 %v222, %v221
    %239 = vmatprep.subr.bf16.mxu0 0
    %240 = vmatpush1.bf16.msra.mxu0 %v230
    %241 = vmatprep.subr.bf16.mxu0 0
    %242 = vmatpush1.bf16.msra.mxu0 %v229
    %243 = vmatprep.subr.bf16.mxu0 0
    %244 = vmatpush1.bf16.msra.mxu0 %v228
    %245 = vmatprep.subr.bf16.mxu0 0
    %246 = vmatpush1.bf16.msra.mxu0 %v227
    %247 = vmatprep.subr.bf16.mxu0 0
    %248 = vmatpush1.bf16.msra.mxu0 %v226
    %249 = vmatprep.subr.bf16.mxu0 0
    %250 = vmatpush1.bf16.msra.mxu0 %v225
    %251 = vmatprep.subr.bf16.mxu0 0
    %252 = vmatpush1.bf16.msra.mxu0 %v224
    %253 = vmatprep.subr.bf16.mxu0 0
    %254 = vmatpush1.bf16.msra.mxu0 %v223
    %255 = vmatprep.subr.bf16.mxu0 0
    %256 = vmatpush2.bf16.msra.mxu0 0
    %257 = vmatprep.subr.bf16.mxu0 0
    %258 = vmatpush2.bf16.msra.mxu0 0
    %259 = vmatprep.subr.bf16.mxu0 0
    %260 = vmatpush2.bf16.msra.mxu0 0
    %261 = vmatprep.subr.bf16.mxu0 0
    %262 = vmatpush2.bf16.msra.mxu0 0
    %263 = vmatprep.subr.bf16.mxu0 0
    %264 = vmatpush2.bf16.msra.mxu0 0
    %265 = vmatprep.subr.bf16.mxu0 0
    %266 = vmatpush2.bf16.msra.mxu0 0
    %267 = vmatprep.subr.bf16.mxu0 0
    %268 = vmatpush2.bf16.msra.mxu0 0
    %269 = vmatprep.subr.bf16.mxu0 0
    %270 = vmatpush2.bf16.msra.mxu0 0
    %271 = vmatprep.mubr.bf16.mxu0 0
    %272 = vmatmul.mubr.bf16.gmra.mxu0 %v170
    %v273 = vpop.f32.mrf.mxu0
    %v274 = vadd.f32 %v190, %v273
    %v275 = vpop.f32.mrf.mxu0
    %v276 = vpop.f32.mrf.mxu0
    %v277 = vpop.f32.mrf.mxu0
    %278 = vdwg.mxu0
    %279 = vst [vmem:[%s3] sm:$0xff] %v274
    // Predicated region
    $region18: #{forward.1} parent=1 // pred_check
      _
    $region19: #{forward.1} parent=1 // pred_check_branch
      %281 = sbr.rel (0) target = $region21
    $region20: #{forward.1} parent=1 // pred_region
      _
    $region21: #{forward.1} parent=1 // pred_fallthru
      _
    // Predicated region
    $region22: #{forward.1} parent=1 // pred_check
      _
    $region23: #{forward.1} parent=1 // pred_check_branch
      %283 = sbr.rel (0) target = $region25
    $region24: #{forward.1} parent=1 // pred_region
      _
    $region25: #{forward.1} parent=1 // pred_fallthru
      _
    %284 = vsyncpa [#allocation3], 1

</llo_original>
